<compile_context>
chip_gen: v7x
topology: tpu7x:2x2x1
jax: 0.10.0
libtpu: 0.0.40
codegen_flags: <defaults>
</compile_context>

<pallas_src>
import jax
import jax.numpy as jnp
from jax.experimental import pallas as pl
from jax.experimental.pallas import tpu as pltpu


def _scale_kernel(s_ref, x_ref, o_ref):
    # s_ref: (1, 1) scalar in SMEM; x_ref/o_ref: (block_rows, LANE) tile in VMEM.
    s = s_ref[0, 0]                      # hoist scalar read out of the vector op
    o_ref[...] = x_ref[...] * s


def scale_forward(x, scale, *, lane=1024, target_block_rows=512):
    """Compute x * scale with a lane-dense, large-tile Pallas kernel.

    x: arbitrary-shape float tensor (e.g. NCHW); scale: scalar parameter.
    """
    orig_shape = x.shape
    total = int(x.size)

    # ---- lane-dense reshape: (rows, lane) with lane a multiple of 128 ----
    rows = (total + lane - 1) // lane

    # ---- pick block rows: big (target ~2 MiB/buffer), multiple of 8 ----
    block_rows = min(target_block_rows, rows)
    block_rows = ((block_rows + 7) // 8) * 8          # sublane-aligned
    rows_padded = ((rows + block_rows - 1) // block_rows) * block_rows

    pad_elems = rows_padded * lane - total
    xf = x.reshape(-1)
    if pad_elems:
        xf = jnp.pad(xf, (0, pad_elems))
    x2d = xf.reshape(rows_padded, lane)

    s = jnp.asarray(scale, dtype=x.dtype).reshape(1, 1)

    grid = (rows_padded // block_rows,)

    out2d = pl.pallas_call(
        _scale_kernel,
        out_shape=jax.ShapeDtypeStruct((rows_padded, lane), x.dtype),
        grid=grid,
        in_specs=[
            pl.BlockSpec(memory_space=pltpu.SMEM),                  # scalar param
            pl.BlockSpec((block_rows, lane), lambda i: (i, 0)),     # x tile
        ],
        out_specs=pl.BlockSpec((block_rows, lane), lambda i: (i, 0)),
        compiler_params=pltpu.CompilerParams(
            dimension_semantics=("parallel",),
            vmem_limit_bytes=32 * 1024 * 1024,
        ),
    )(s, x2d)

    out = out2d.reshape(-1)
    if pad_elems:
        out = out[:total]
    return out.reshape(orig_shape)


if __name__ == "__main__":
    key = jax.random.PRNGKey(0)
    # Deterministic parameter init, matching nn.Parameter(torch.tensor(10.0)).
    scale_param = jnp.float32(10.0)

    # Small NCHW input consistent with the module's usage.
    x = jax.random.normal(key, (2, 4, 16, 16), dtype=jnp.float32)

    out = scale_forward(x, scale_param)
    out = jax.block_until_ready(out)

    # Sanity check against the trivial reference.
    ref = x * scale_param
    assert out.shape == x.shape
    assert jnp.allclose(out, ref, atol=1e-6, rtol=1e-6)

    print("KERNEL_OK")
</pallas_src>

<mosaic_0001>
module attributes {stable_mosaic.version = 11 : i64} {
  func.func @_scale_kernel(%arg0: i32, %arg1: memref<1x1xf32, #tpu.memory_space<smem>>, %arg2: memref<8x1024xf32, #tpu.memory_space<vmem>>, %arg3: memref<8x1024xf32, #tpu.memory_space<vmem>>) attributes {dimension_semantics = [#tpu.dimension_semantics<parallel>], iteration_bounds = array<i64: 1>, scalar_prefetch = 0 : i64, scratch_operands = 0 : i64, tpu.core_type = #tpu.core_type<tc>, window_params = [{transform_indices = @transform_0, window_bounds = array<i64: 1, 1>}, {transform_indices = @transform_1, window_bounds = array<i64: 8, 1024>}, {transform_indices = @transform_2, window_bounds = array<i64: 8, 1024>}]} {
    %c0 = arith.constant 0 : index
    %c0_0 = arith.constant 0 : index
    %0 = memref.load %arg1[%c0, %c0_0] : memref<1x1xf32, #tpu.memory_space<smem>>
    %c0_1 = arith.constant 0 : index
    %c0_2 = arith.constant 0 : index
    %1 = vector.load %arg2[%c0_1, %c0_2] : memref<8x1024xf32, #tpu.memory_space<vmem>>, vector<8x1024xf32>
    %2 = vector.broadcast %0 : f32 to vector<8x1024xf32>
    %3 = arith.mulf %1, %2 : vector<8x1024xf32>
    %c0_3 = arith.constant 0 : index
    %c0_4 = arith.constant 0 : index
    %4 = vector.load %arg3[%c0_3, %c0_4] : memref<8x1024xf32, #tpu.memory_space<vmem>>, vector<8x1024xf32>
    tpu.vector_store %arg3[%c0_3, %c0_4], %3 {strides = array<i32>} : memref<8x1024xf32, #tpu.memory_space<vmem>>, vector<8x1024xf32>,
    return
  }
  func.func @transform_0(%arg0: i32) -> (i32, i32) {
    %c0_i32 = arith.constant 0 : i32
    %c0_i32_0 = arith.constant 0 : i32
    %c0_i32_1 = arith.constant 0 : i32
    return %c0_i32, %c0_i32_0 : i32, i32
  }
  func.func @transform_1(%arg0: i32) -> (i32, i32) {
    %c0_i32 = arith.constant 0 : i32
    %c0_i32_0 = arith.constant 0 : i32
    return %arg0, %c0_i32 : i32, i32
  }
  func.func @transform_2(%arg0: i32) -> (i32, i32) {
    %c0_i32 = arith.constant 0 : i32
    %c0_i32_0 = arith.constant 0 : i32
    return %arg0, %c0_i32 : i32, i32
  }
}

</mosaic_0001>

<llo_original>
// kernel: tpu_custom_call.1
$region0: #{tpu_custom_call.1}
  #allocation0 [shape = 'u32[]', space=smem, size = 0x4, offset = 0x4, fixed_abs, tag = 'smem constant byte address 0x4 - core index']
  #allocation1 [shape = 'u32[144,128]{1,0:T(1,128)}', space=vmem, size = 0x12000, scoped, tag = 'internal scratch']
  #allocation2 [shape = 'f32[1,1]{1,0:T(1,128)S(6)}', space=smem, size = 0x200, scoped, tag = 'scoped memory for tpu_custom_call.1']
  %s0 = inlined_call_operand.<no memory space> [shape: f32[1,1], index: 0, kind: input, shape index: {}]
  %s1 = inlined_call_operand.hbm [shape: f32[8,1024], index: 1, kind: input, shape index: {}]
  %s2 = inlined_call_operand.hbm [shape: f32[8,1024], index: 2, kind: output, shape index: {}]
  %s3 = sld [smem:[#allocation0]]
  $region22: #{tpu_custom_call.1} parent=0
    _
  %s5 = ssub.s32 1, %s3
  %s6 = scalar_select 0, %s5, %s3
  %7 = sst [smem:[#allocation2]] %s0
  $region1: #{tpu_custom_call.1} parent=0
    #allocation3 [shape = 'u8[32768]{0}', space=vmem, size = 0x8000, scoped, tag = 'input window, operand 1, single buffered']
    #allocation4 [shape = 's32[1]{0}', space=sflag, size = 0x4, scoped, tag = 'scoped memory for tpu_custom_call.1']
    #allocation5 [shape = 's32[1]{0}', space=sflag, size = 0x4, scoped, tag = 'scoped memory for tpu_custom_call.1']
    #allocation6 [shape = 'u8[32768]{0}', space=vmem, size = 0x8000, scoped, tag = 'output window, operand 0, single buffered']
    %8 = vsyncpa [#allocation4], 0
    %9 = vsyncpa [#allocation5], 0
    // Predicated region
    $region2: #{tpu_custom_call.1} parent=1 // pred_check
      _
    $region3: #{tpu_custom_call.1} parent=1 // pred_check_branch
      %11 = sbr.rel (0) target = $region5
    $region4: #{tpu_custom_call.1} parent=1 // pred_region
      _
    $region5: #{tpu_custom_call.1} parent=1 // pred_fallthru
      _
    // Predicated region
    $region6: #{tpu_custom_call.1} parent=1 // pred_check
      _
    $region7: #{tpu_custom_call.1} parent=1 // pred_check_branch
      %13 = sbr.rel (0) target = $region9
    $region8: #{tpu_custom_call.1} parent=1 // pred_region
      %s15 = ssub.s32 1024, 1024
      %16 = vsyncadd [#allocation4], %s15
      %s18 = sshll.u32 [#allocation3], 4
      %s19 = int_to_ptr.vmem [resolvable:$true] %s18
      %21 = dma.hbm_to_vmem [thread:$0]  %s1, 1024, %s19, [#allocation4]
    $region9: #{tpu_custom_call.1} parent=1 // pred_fallthru
      _
    // Predicated region
    $region10: #{tpu_custom_call.1} parent=1 // pred_check
      _
    $region11: #{tpu_custom_call.1} parent=1 // pred_check_branch
      %23 = sbr.rel (0) target = $region13
    $region12: #{tpu_custom_call.1} parent=1 // pred_region
      %24 = dma.done [#allocation4], 1024
    $region13: #{tpu_custom_call.1} parent=1 // pred_fallthru
      _
    %s25 = sld [smem:[#allocation2]]
    %v26 = vld [vmem:[#allocation3] sm:$0xff]
    %v27 = vld [vmem:[#allocation3 + $0x8] sm:$0xff]
    %v28 = vld [vmem:[#allocation3 + $0x10] sm:$0xff]
    %v29 = vld [vmem:[#allocation3 + $0x18] sm:$0xff]
    %v30 = vld [vmem:[#allocation3 + $0x20] sm:$0xff]
    %v31 = vld [vmem:[#allocation3 + $0x28] sm:$0xff]
    %v32 = vld [vmem:[#allocation3 + $0x30] sm:$0xff]
    %v33 = vld [vmem:[#allocation3 + $0x38] sm:$0xff]
    %v34 = vstv %s25
    %v35 = vmul.f32 %v26, %v34
    %v36 = vmul.f32 %v27, %v34
    %v37 = vmul.f32 %v28, %v34
    %v38 = vmul.f32 %v29, %v34
    %v39 = vmul.f32 %v30, %v34
    %v40 = vmul.f32 %v31, %v34
    %v41 = vmul.f32 %v32, %v34
    %v42 = vmul.f32 %v33, %v34
    %43 = vst [vmem:[#allocation6] sm:$0xff] %v35
    %44 = vst [vmem:[#allocation6 + $0x8] sm:$0xff] %v36
    %45 = vst [vmem:[#allocation6 + $0x10] sm:$0xff] %v37
    %46 = vst [vmem:[#allocation6 + $0x18] sm:$0xff] %v38
    %47 = vst [vmem:[#allocation6 + $0x20] sm:$0xff] %v39
    %48 = vst [vmem:[#allocation6 + $0x28] sm:$0xff] %v40
    %49 = vst [vmem:[#allocation6 + $0x30] sm:$0xff] %v41
    %50 = vst [vmem:[#allocation6 + $0x38] sm:$0xff] %v42
    // Predicated region
    $region14: #{tpu_custom_call.1} parent=1 // pred_check
      _
    $region15: #{tpu_custom_call.1} parent=1 // pred_check_branch
      %52 = sbr.rel (0) target = $region17
    $region16: #{tpu_custom_call.1} parent=1 // pred_region
      %s54 = ssub.s32 1024, 1024
      %55 = vsyncadd [#allocation5], %s54
      %s57 = sshll.u32 [#allocation6], 4
      %s58 = int_to_ptr.vmem [resolvable:$true] %s57
      %60 = dma.vmem_to_hbm [thread:$0]  %s58, 1024, %s2, [#allocation5]
    $region17: #{tpu_custom_call.1} parent=1 // pred_fallthru
      _
    // Predicated region
    $region18: #{tpu_custom_call.1} parent=1 // pred_check
      _
    $region19: #{tpu_custom_call.1} parent=1 // pred_check_branch
      %62 = sbr.rel (0) target = $region21
    $region20: #{tpu_custom_call.1} parent=1 // pred_region
      %63 = dma.done [#allocation5], 1024
    $region21: #{tpu_custom_call.1} parent=1 // pred_fallthru
      _
    %64 = vsyncpa [#allocation4], 1
    %65 = vsyncpa [#allocation5], 1

</llo_original>
